<compile_context>
chip_gen: v7x
topology: tpu7x:2x2x1
jax: 0.10.0
libtpu: 0.0.40
codegen_flags: <defaults>
</compile_context>

<pallas_src>
import functools

import jax
import jax.numpy as jnp
from jax.experimental import pallas as pl
from jax.experimental.pallas import tpu as pltpu


def _drop_path_kernel(scale_ref, x_ref, o_ref, *, batch_block):
    """o = x * scale, scale broadcast along lanes.

    scale_ref : full (Bp, 1) f32 array, resident in VMEM for the whole grid.
    x_ref/o_ref : (Bb, Tm) tiles of the flattened activation.
    """
    i = pl.program_id(0)
    s = scale_ref[pl.ds(i * batch_block, batch_block), :]          # (Bb, 1) f32
    o_ref[...] = (x_ref[...].astype(jnp.float32) * s).astype(o_ref.dtype)


def _vmem_capacity_bytes():
    """Per-core VMEM capacity; conservative (v7x-sized) fallback if query fails."""
    try:
        cap = getattr(pltpu.get_tpu_info(), "vmem_capacity_bytes", None)
        if cap:
            return int(cap)
    except Exception:
        pass
    return 64 << 20


def _choose_batch_block(B, elem_bytes):
    """Sublane-packing-aware batch block: 8 rows f32, 16 bf16, 32 int8/fp8."""
    packing = max(1, 4 // max(1, elem_bytes))
    base = 8 * packing
    return B if B <= base else base


def _choose_lane_block(Mp, Bb, elem_bytes, target_bytes):
    """Largest lane block (multiple of 128, <= Mp) near target_bytes."""
    lanes = (target_bytes // max(1, Bb * elem_bytes)) // 128 * 128
    return int(min(max(128, lanes), Mp))


def drop_path(x, drop_prob, training, *, key=None, seed=0):
    """JAX/Pallas equivalent of mmpose drop_path(x, drop_prob, training)."""
    if drop_prob is None or float(drop_prob) == 0.0 or not training:
        return x
    drop_prob = float(drop_prob)
    if drop_prob >= 1.0:
        # Probabilistic limit: every sample dropped. (PyTorch would produce
        # NaN via x/0 * 0; an explicit zero output is the sane guard.)
        return jnp.zeros_like(x)

    keep_prob = 1.0 - drop_prob
    if key is None:
        key = jax.random.PRNGKey(seed)

    orig_shape = x.shape
    B = x.shape[0]
    x2 = x.reshape(B, -1)
    M = x2.shape[1]
    elem_bytes = jnp.dtype(x2.dtype).itemsize

    # Pad the flattened feature dim to a multiple of 128 so all output tiles
    # (including the tail) lower to unmasked, full-width stores.
    Mp = (-(-M // 128)) * 128
    if Mp != M:
        x2 = jnp.pad(x2, ((0, 0), (0, Mp - M)))

    # Per-sample Bernoulli folded with 1/keep_prob into an f32 scale vector.
    keep = jax.random.bernoulli(key, p=keep_prob, shape=(B,))
    scale = (keep.astype(jnp.float32) * (1.0 / keep_prob)).reshape(B, 1)

    # Generation-aware tiling target.
    vmem_cap = _vmem_capacity_bytes()
    target_bytes = (4 << 20) if vmem_cap <= (64 << 20) else (8 << 20)

    Bb = _choose_batch_block(B, elem_bytes)
    Tm = _choose_lane_block(Mp, Bb, elem_bytes, target_bytes)
    grid_b = pl.cdiv(B, Bb)
    grid_m = pl.cdiv(Mp, Tm)

    # Ensure enough independent grid steps for v7x's two TensorCores to both
    # get work (costs only ~0.35 us/extra step on single-TC v5e/v6e).
    MIN_GRID_STEPS = 4
    if grid_b * grid_m < MIN_GRID_STEPS and Mp > 128:
        needed_m = -(-MIN_GRID_STEPS // grid_b)
        tm_chunks = max(1, (Mp // 128) // needed_m)
        Tm = min(Tm, tm_chunks * 128)
        grid_m = pl.cdiv(Mp, Tm)

    # Pad the scale so the kernel's dynamic row slice never goes OOB on a
    # ragged final batch block (those x rows are masked on store anyway).
    Bp = grid_b * Bb
    if Bp != B:
        scale = jnp.pad(scale, ((0, Bp - B), (0, 0)))

    # VMEM budget from the actual footprint: double-buffered in + out tiles
    # plus the resident scale vector, with ~1 MiB slack.
    tile_bytes = Bb * Tm * elem_bytes
    footprint = 4 * tile_bytes + Bp * 4 + (1 << 20)
    vmem_limit = int(min(max(footprint, 16 << 20), (3 * vmem_cap) // 4))

    y2 = pl.pallas_call(
        functools.partial(_drop_path_kernel, batch_block=Bb),
        out_shape=jax.ShapeDtypeStruct((B, Mp), x2.dtype),
        grid=(grid_b, grid_m),
        in_specs=[
            # Tiny (Bp, 1) scale: fully VMEM-resident, no per-step DMA.
            pl.BlockSpec(memory_space=pltpu.MemorySpace.VMEM),
            pl.BlockSpec((Bb, Tm), lambda i, j: (i, j)),
        ],
        out_specs=pl.BlockSpec((Bb, Tm), lambda i, j: (i, j)),
        compiler_params=pltpu.CompilerParams(
            dimension_semantics=("parallel", "parallel"),
            vmem_limit_bytes=vmem_limit,
        ),
    )(scale, x2)

    if Mp != M:
        y2 = y2[:, :M]
    # TODO(synk): the real HBM win is fusing this per-sample scale into the
    # adjacent residual add (out = residual + scale * branch) — a standalone
    # DropPath is pinned at the read+write roofline. input_output_aliases
    # would only donate the output buffer; it does NOT reduce HBM traffic.
    return y2.reshape(orig_shape)


class DropPath:
    """Module-style wrapper matching the PyTorch DropPath API."""

    def __init__(self, drop_prob=None):
        self.drop_prob = drop_prob
        self.training = True

    def __call__(self, x, *, key=None, seed=0):
        return drop_path(x, self.drop_prob, self.training, key=key, seed=seed)


if __name__ == "__main__":
    data_key = jax.random.PRNGKey(0)
    k1, k2 = jax.random.split(data_key)

    # Case 1: lane-aligned f32 tokens (B, N, C).
    x_a = jax.random.normal(k1, (2, 8, 128), dtype=jnp.float32)
    # Case 2: odd channel count + bf16 (exercises 128-lane padding + packing).
    x_b = jax.random.normal(k2, (3, 7, 100), dtype=jnp.bfloat16)

    drop_prob = 0.2
    keep_prob = 1.0 - drop_prob
    mod = DropPath(drop_prob=drop_prob)
    mod.training = True

    for name, x, tol in (("f32", x_a, 1e-5), ("bf16", x_b, 2e-2)):
        y = jax.block_until_ready(mod(x, key=jax.random.PRNGKey(42)))
        assert y.shape == x.shape and y.dtype == x.dtype
        # Each sample must be exactly 0 or x / keep_prob.
        for b in range(x.shape[0]):
            yb = y[b].astype(jnp.float32)
            xb = x[b].astype(jnp.float32)
            is_zero = bool(jnp.all(yb == 0.0))
            is_scaled = bool(jnp.allclose(yb, xb / keep_prob, rtol=tol, atol=tol))
            assert is_zero or is_scaled, f"{name}: sample {b} not a mask/scale of x"

    # Eval mode: identity.
    mod.training = False
    y_eval = jax.block_until_ready(mod(x_a))
    assert bool(jnp.array_equal(y_eval, x_a)), "eval mode must be identity"

    # drop_prob >= 1.0 guard: all-zero output (PyTorch's NaN limit is guarded).
    mod_full = DropPath(drop_prob=1.0)
    mod_full.training = True
    y_full = jax.block_until_ready(mod_full(x_a, key=jax.random.PRNGKey(7)))
    assert bool(jnp.all(y_full == 0.0))

    print("KERNEL_OK")
</pallas_src>

<mosaic_0001>
module attributes {stable_mosaic.version = 11 : i64} {
  func.func @_drop_path_kernel(%arg0: i32, %arg1: i32, %arg2: memref<2x1xf32, #tpu.memory_space<vmem>>, %arg3: memref<2x256xf32, #tpu.memory_space<vmem>>, %arg4: memref<2x256xf32, #tpu.memory_space<vmem>>) attributes {dimension_semantics = [#tpu.dimension_semantics<parallel>, #tpu.dimension_semantics<parallel>], iteration_bounds = array<i64: 1, 4>, scalar_prefetch = 0 : i64, scratch_operands = 0 : i64, tpu.core_type = #tpu.core_type<tc>, window_params = [{pipeline_mode = #tpu.pipeline_mode<synchronous>, transform_indices = @transform_0, window_bounds = array<i64: 2, 1>}, {transform_indices = @transform_1, window_bounds = array<i64: 2, 256>}, {transform_indices = @transform_2, window_bounds = array<i64: 2, 256>}]} {
    %c2_i32 = arith.constant 2 : i32
    %0 = arith.muli %arg0, %c2_i32 : i32
    %1 = arith.index_cast %0 : i32 to index
    %c0 = arith.constant 0 : index
    %2 = vector.load %arg2[%1, %c0] : memref<2x1xf32, #tpu.memory_space<vmem>>, vector<2x1xf32>
    %c0_0 = arith.constant 0 : index
    %c0_1 = arith.constant 0 : index
    %3 = vector.load %arg3[%c0_0, %c0_1] : memref<2x256xf32, #tpu.memory_space<vmem>>, vector<2x256xf32>
    %4 = vector.broadcast %2 : vector<2x1xf32> to vector<2x256xf32>
    %5 = arith.mulf %3, %4 : vector<2x256xf32>
    %c0_2 = arith.constant 0 : index
    %c0_3 = arith.constant 0 : index
    %6 = vector.load %arg4[%c0_2, %c0_3] : memref<2x256xf32, #tpu.memory_space<vmem>>, vector<2x256xf32>
    tpu.vector_store %arg4[%c0_2, %c0_3], %5 {strides = array<i32>} : memref<2x256xf32, #tpu.memory_space<vmem>>, vector<2x256xf32>,
    return
  }
  func.func @transform_0(%arg0: i32, %arg1: i32) -> (i32, i32) {
    %c0_i32 = arith.constant 0 : i32
    %c0_i32_0 = arith.constant 0 : i32
    %c0_i32_1 = arith.constant 0 : i32
    return %c0_i32, %c0_i32_0 : i32, i32
  }
  func.func @transform_1(%arg0: i32, %arg1: i32) -> (i32, i32) {
    %c0_i32 = arith.constant 0 : i32
    return %arg0, %arg1 : i32, i32
  }
  func.func @transform_2(%arg0: i32, %arg1: i32) -> (i32, i32) {
    %c0_i32 = arith.constant 0 : i32
    return %arg0, %arg1 : i32, i32
  }
}

</mosaic_0001>

<llo_original>
// kernel: tpu_custom_call.1
$region0: #{tpu_custom_call.1}
  #allocation0 [shape = 'u32[]', space=smem, size = 0x4, offset = 0x4, fixed_abs, tag = 'smem constant byte address 0x4 - core index']
  #allocation1 [shape = 'u32[144,128]{1,0:T(1,128)}', space=vmem, size = 0x12000, scoped, tag = 'internal scratch']
  %s0 = inlined_call_operand.vmem [shape: f32[2,1], index: 0, kind: input, shape index: {}]
  %s1 = inlined_call_operand.hbm [shape: f32[2,1024], index: 1, kind: input, shape index: {}]
  %s2 = inlined_call_operand.hbm [shape: f32[2,1024], index: 2, kind: output, shape index: {}]
  %s3 = sld [smem:[#allocation0]]
  $region45: #{tpu_custom_call.1} parent=0
    _
  %s5 = ssub.s32 1, %s3
  %s6 = scalar_select 0, %s5, %s3
  $region1: #{tpu_custom_call.1} parent=0
    #allocation2 [shape = 'u8[4096]{0}', space=vmem, size = 0x1000, scoped, tag = 'input window, operand 1']
    #allocation3 [shape = 's32[2]{0}', space=sflag, size = 0x8, scoped, tag = 'scoped memory for tpu_custom_call.1']
    #allocation4 [shape = 's32[2]{0}', space=sflag, size = 0x8, scoped, tag = 'scoped memory for tpu_custom_call.1']
    #allocation5 [shape = 'u8[4096]{0}', space=vmem, size = 0x1000, scoped, tag = 'output window, operand 0']
    %7 = vsyncpa [#allocation3], 0
    %s8 = scalar_lea.sflag [#allocation3], 1
    %9 = vsyncpa %s8, 0
    %10 = vsyncpa [#allocation4], 0
    %s11 = scalar_lea.sflag [#allocation4], 1
    %12 = vsyncpa %s11, 0
    loop: start=0, step=1, limit=6
    $region2: #{tpu_custom_call.1} parent=1 // loop_pre_header
      _
    $region3: #{tpu_custom_call.1} parent=1 // loop_header
      %s14 = sphi 0, %s18
      %p15 = scmp.ge.s32.totalorder %s14, 6
      %s21 = sphi 0, %s33
      %s22 = sphi 0, %s29
      %s23 = sphi 0, %s21
      %s24 = sphi 0, %s22
      %s25 = sphi 0, %s23
      %s26 = sphi 0, %s24
      %s34 = sphi 0, %s34
      %s36 = sphi 0, %s34
      %s37 = sphi 0, %s36
      %s51 = sphi 0, %s37
      %s59 = sphi 0, %s61
      %s62 = sphi 0, %s59
      %s63 = sphi 0, %s62
      %s79 = sphi 0, %s63
      %s87 = sphi 0, %s89
      %s90 = sphi 0, %s87
      %s91 = sphi 0, %s90
      %s107 = sphi 0, %s91
    $region4: #{tpu_custom_call.1} parent=1 // loop_header_branch
      %17 = sbr.rel (%p15) target = $region8
    $region5: #{tpu_custom_call.1} parent=1 // loop_body
      %s19 = ssub.s32 %s14, 1
      %s20 = ssub.s32 %s14, 2
      %s27 = sadd.s32 1, %s22
      %p28 = scmp.ge.s32.totalorder %s27, 4
      %s29 = scalar_select %p28, 0, %s27
      %s30 = sadd.s32 1, %s21
      %s31 = scalar_select %p28, %s30, %s21
      %p32 = scmp.ge.s32.totalorder %s31, 1
      %s33 = scalar_select %p32, 0, %s31
      %s35 = sadd.s32 %s34, 1
      %p38 = scmp.eq.s32.totalorder %s14, 3
      %p39 = scmp.ne.s32.totalorder %s34, %s36
      %p40 = scmp.eq.s32.totalorder %s14, 0
      %p41 = por %p39, %p40
      %p42 = scmp.ne.s32.totalorder %s34, %s36
      %p43 = scmp.eq.s32.totalorder %s19, 3
      %p44 = por %p42, %p43
      %p45 = scmp.ne.s32.totalorder %s36, %s37
      %p46 = scmp.eq.s32.totalorder %s19, 0
      %p47 = por %p45, %p46
      %p48 = scmp.ne.s32.totalorder %s36, %s37
      %p49 = scmp.eq.s32.totalorder %s20, 3
      %p50 = por %p48, %p49
      %p52 = scmp.ne.s32.totalorder %s37, %s51
      %p53 = scmp.eq.s32.totalorder %s20, 0
      %p54 = por %p52, %p53
      %s55 = ssub.s32 %s21, %s33
      %s56 = ssub.s32 %s22, %s29
      %s57 = sor.u32 %s55, %s56
      %p58 = scmp.eq.s32.totalorder %s57, 0
      %s60 = sadd.s32 %s59, 1
      %s61 = scalar_select %p58, %s59, %s60
      %p64 = pneg %p58
      %p65 = scmp.eq.s32.totalorder %s14, 3
      %p66 = por %p64, %p65
      %p67 = scmp.ne.s32.totalorder %s59, %s62
      %p68 = scmp.eq.s32.totalorder %s14, 0
      %p69 = por %p67, %p68
      %p70 = scmp.ne.s32.totalorder %s59, %s62
      %p71 = scmp.eq.s32.totalorder %s19, 3
      %p72 = por %p70, %p71
      %p73 = scmp.ne.s32.totalorder %s62, %s63
      %p74 = scmp.eq.s32.totalorder %s19, 0
      %p75 = por %p73, %p74
      %p76 = scmp.ne.s32.totalorder %s62, %s63
      %p77 = scmp.eq.s32.totalorder %s20, 3
      %p78 = por %p76, %p77
      %p80 = scmp.ne.s32.totalorder %s63, %s79
      %p81 = scmp.eq.s32.totalorder %s20, 0
      %p82 = por %p80, %p81
      %s83 = ssub.s32 %s21, %s33
      %s84 = ssub.s32 %s22, %s29
      %s85 = sor.u32 %s83, %s84
      %p86 = scmp.eq.s32.totalorder %s85, 0
      %s88 = sadd.s32 %s87, 1
      %s89 = scalar_select %p86, %s87, %s88
      %p92 = pneg %p86
      %p93 = scmp.eq.s32.totalorder %s14, 3
      %p94 = por %p92, %p93
      %p95 = scmp.ne.s32.totalorder %s87, %s90
      %p96 = scmp.eq.s32.totalorder %s14, 0
      %p97 = por %p95, %p96
      %p98 = scmp.ne.s32.totalorder %s87, %s90
      %p99 = scmp.eq.s32.totalorder %s19, 3
      %p100 = por %p98, %p99
      %p101 = scmp.ne.s32.totalorder %s90, %s91
      %p102 = scmp.eq.s32.totalorder %s19, 0
      %p103 = por %p101, %p102
      %p104 = scmp.ne.s32.totalorder %s90, %s91
      %p105 = scmp.eq.s32.totalorder %s20, 3
      %p106 = por %p104, %p105
      %p108 = scmp.ne.s32.totalorder %s91, %s107
      %p109 = scmp.eq.s32.totalorder %s20, 0
      %p110 = por %p108, %p109
      %p111 = scmp.le.s32.totalorder 1, %s14
      %p112 = scmp.lt.s32.totalorder %s14, 5
      %p113 = pnand %p111, %p112
      %p114 = pneg %p113
      // Predicated region
      $region9: #{tpu_custom_call.1} parent=5 // pred_check
        _
      $region10: #{tpu_custom_call.1} parent=5 // pred_check_branch
        %116 = sbr.rel (%p113) target = $region12
      $region11: #{tpu_custom_call.1} parent=5 // pred_region
        %s117 = ssub.s32 %s14, 1
        // Predicated region
        $region13: #{tpu_custom_call.1} parent=11 // pred_check
          %p118 = pneg %p47
        $region14: #{tpu_custom_call.1} parent=11 // pred_check_branch
          %120 = sbr.rel (%p118) target = $region16
        $region15: #{tpu_custom_call.1} parent=11 // pred_region
          _
        $region16: #{tpu_custom_call.1} parent=11 // pred_fallthru
          _
      $region12: #{tpu_custom_call.1} parent=5 // pred_fallthru
        _
      %p121 = scmp.lt.s32.totalorder %s14, 4
      // Predicated region
      $region17: #{tpu_custom_call.1} parent=5 // pred_check
        %p122 = pneg %p121
      $region18: #{tpu_custom_call.1} parent=5 // pred_check_branch
        %124 = sbr.rel (%p122) target = $region20
      $region19: #{tpu_custom_call.1} parent=5 // pred_region
        // Predicated region
        $region21: #{tpu_custom_call.1} parent=19 // pred_check
          %p125 = pneg %p69
        $region22: #{tpu_custom_call.1} parent=19 // pred_check_branch
          %127 = sbr.rel (%p125) target = $region24
        $region23: #{tpu_custom_call.1} parent=19 // pred_region
          %s128 = sand.u32 %s59, 1
          %s129 = scalar_lea.sflag [#allocation3], %s128
          %s130 = sand.u32 %s59, 1
          %s131 = smul.addr %s130, 4
          %s132 = scalar_lea.vmem [#allocation2], %s131
          %s133 = smul.u32 2, %s22
          %s135 = ssub.s32 64, 64
          %136 = vsyncadd %s129, %s135
          %s137 = smul.addr %s21, 8
          %s138 = sadd.s32 %s133, %s137
          %s139 = smul.addr %s138, 32
          %s140 = scalar_lea.hbm %s1, %s139
          %s142 = sshll.u32 %s132, 4
          %s143 = int_to_ptr.vmem [resolvable:$true] %s142
          %145 = dma.hbm_to_vmem [thread:$0]  %s140, 64, %s143, %s129
        $region24: #{tpu_custom_call.1} parent=19 // pred_fallthru
          _
      $region20: #{tpu_custom_call.1} parent=5 // pred_fallthru
        _
      %p146 = scmp.le.s32.totalorder 1, %s14
      %p147 = scmp.lt.s32.totalorder %s14, 5
      %p148 = pnand %p146, %p147
      %p149 = pneg %p148
      // Predicated region
      $region25: #{tpu_custom_call.1} parent=5 // pred_check
        _
      $region26: #{tpu_custom_call.1} parent=5 // pred_check_branch
        %151 = sbr.rel (%p148) target = $region28
      $region27: #{tpu_custom_call.1} parent=5 // pred_region
        %s152 = ssub.s32 %s14, 1
        %s153 = sand.u32 %s62, 1
        %s154 = scalar_lea.sflag [#allocation3], %s153
        %s155 = sand.u32 %s62, 1
        %s156 = smul.addr %s155, 4
        %s157 = scalar_lea.vmem [#allocation2], %s156
        // Predicated region
        $region29: #{tpu_custom_call.1} parent=27 // pred_check
          %p158 = pneg %p75
        $region30: #{tpu_custom_call.1} parent=27 // pred_check_branch
          %160 = sbr.rel (%p158) target = $region32
        $region31: #{tpu_custom_call.1} parent=27 // pred_region
          %161 = dma.done %s154, 64
        $region32: #{tpu_custom_call.1} parent=27 // pred_fallthru
          _
        %p162 = pneg %p47
        %p163 = pneg %p44
        %s164 = sand.u32 %s62, 1
        %s165 = scalar_lea.sflag [#allocation3], %s164
        %s166 = sand.u32 %s62, 1
        %s167 = smul.addr %s166, 4
        %s168 = scalar_lea.vmem [#allocation2], %s167
        %p169 = pneg %p75
        %p170 = pneg %p72
        %p171 = pneg %p103
        %p172 = pneg %p100
        %s173 = sand.u32 %s90, 1
        %s174 = scalar_lea.sflag [#allocation4], %s173
        %s175 = sand.u32 %s90, 1
        %s176 = smul.addr %s175, 4
        %s177 = scalar_lea.vmem [#allocation5], %s176
        %s178 = smul.u32 2, %s24
        %s179 = smul.u32 2, %s24
        %s180 = smul.u32 %s23, 2
        %s181 = scalar_lea.vmem %s0, %s180
        %v182 = vld [vmem:[%s181] sm:$0x3]
        %v183 = vld [vmem:[%s157] sm:$0xf]
        %185 = vset.pattern.permute.xlu0 0
        %186 = vperm.xlu0 %185, %v182
        %v187 = vpop.permute.xlu0 %186
        %v189 = vunpack.c.l.s4 269488144
        %v190 = vunpack.c.0.s8 %v189
        %v191 = vlaneseq
        %v192 = vshrl.u32 %v191, 7
        %v193 = vsub.s32 %v190, %v192
        %v194 = vrot.slane %v187, %v193
        %v196 = vmul.f32 %v183, %v194
        %197 = vst [vmem:[%s177] sm:$0xf] %v196
        %s198 = sand.u32 %s90, 1
        %s199 = scalar_lea.sflag [#allocation4], %s198
        %s200 = sand.u32 %s90, 1
        %s201 = smul.addr %s200, 4
        %s202 = scalar_lea.vmem [#allocation5], %s201
        // Predicated region
        $region33: #{tpu_custom_call.1} parent=27 // pred_check
          %p203 = pneg %p100
        $region34: #{tpu_custom_call.1} parent=27 // pred_check_branch
          %205 = sbr.rel (%p203) target = $region36
        $region35: #{tpu_custom_call.1} parent=27 // pred_region
          %s206 = smul.u32 2, %s24
          %s208 = ssub.s32 64, 64
          %209 = vsyncadd %s199, %s208
          %s210 = smul.addr %s23, 8
          %s211 = sadd.s32 %s206, %s210
          %s212 = smul.addr %s211, 32
          %s213 = scalar_lea.hbm %s2, %s212
          %s215 = sshll.u32 %s202, 4
          %s216 = int_to_ptr.vmem [resolvable:$true] %s215
          %218 = dma.vmem_to_hbm [thread:$0]  %s216, 64, %s213, %s199
        $region36: #{tpu_custom_call.1} parent=27 // pred_fallthru
          _
      $region28: #{tpu_custom_call.1} parent=5 // pred_fallthru
        _
      %p219 = scmp.le.s32.totalorder 2, %s14
      // Predicated region
      $region37: #{tpu_custom_call.1} parent=5 // pred_check
        %p220 = pneg %p219
      $region38: #{tpu_custom_call.1} parent=5 // pred_check_branch
        %222 = sbr.rel (%p220) target = $region40
      $region39: #{tpu_custom_call.1} parent=5 // pred_region
        %s223 = ssub.s32 %s14, 2
        // Predicated region
        $region41: #{tpu_custom_call.1} parent=39 // pred_check
          %p224 = pneg %p106
        $region42: #{tpu_custom_call.1} parent=39 // pred_check_branch
          %226 = sbr.rel (%p224) target = $region44
        $region43: #{tpu_custom_call.1} parent=39 // pred_region
          %s227 = sand.u32 %s91, 1
          %s228 = scalar_lea.sflag [#allocation4], %s227
          %s229 = sand.u32 %s91, 1
          %s230 = smul.addr %s229, 4
          %s231 = scalar_lea.vmem [#allocation5], %s230
          %232 = dma.done %s228, 64
        $region44: #{tpu_custom_call.1} parent=39 // pred_fallthru
          _
      $region40: #{tpu_custom_call.1} parent=5 // pred_fallthru
        _
    $region6: #{tpu_custom_call.1} parent=1 // loop_footer
      %s18 = sadd.s32 1, %s14
    $region7: #{tpu_custom_call.1} parent=1 // loop_footer_branch
      %13 = sbr.rel target = $region3
    $region8: #{tpu_custom_call.1} parent=1 // loop_exit
      _
    %233 = vsyncpa [#allocation3], 1
    %s234 = scalar_lea.sflag [#allocation3], 1
    %235 = vsyncpa %s234, 1
    %236 = vsyncpa [#allocation4], 1
    %s237 = scalar_lea.sflag [#allocation4], 1
    %238 = vsyncpa %s237, 1

</llo_original>
